<compile_context>
chip_gen: v7x
topology: tpu7x:2x2x1
jax: 0.10.0
libtpu: 0.0.40
codegen_flags: <defaults>
</compile_context>

<pallas_src>
import math

import jax
import jax.numpy as jnp
from jax.experimental import pallas as pl
from jax.experimental.pallas import tpu as pltpu

_LANE = 128
_SOFTPLUS_THRESHOLD = 20.0


def _mish_kernel(x_ref, o_ref):
    x = x_ref[...]
    xf = x.astype(jnp.float32)
    # tanh(softplus(x)) = tanh(log1p(e)) = (e^2 + 2e) / (e^2 + 2e + 2), e = exp(x).
    # Clamp the exp argument so the untaken where-branch never overflows
    # (garbage rows of a clipped last block also stay finite).
    e = jnp.exp(jnp.minimum(xf, _SOFTPLUS_THRESHOLD))
    num = e * (e + 2.0)
    t = num / (num + 2.0)
    # PyTorch F.softplus threshold: for x > 20, softplus(x) = x and tanh(x) == 1 in f32.
    y = jnp.where(xf > _SOFTPLUS_THRESHOLD, xf, xf * t)
    o_ref[...] = y.astype(o_ref.dtype)


def _mish_jnp(x):
    """Plain-JAX Mish for tiny (< 128-element) non-lane-aligned tails."""
    xf = x.astype(jnp.float32)
    e = jnp.exp(jnp.minimum(xf, _SOFTPLUS_THRESHOLD))
    num = e * (e + 2.0)
    y = jnp.where(xf > _SOFTPLUS_THRESHOLD, xf, xf * (num / (num + 2.0)))
    return y.astype(x.dtype)


def _mish_2d(x2, *, target_block_bytes, min_grid_steps, donate):
    """Run the Pallas Mish kernel over a lane-dense (rows, lanes) view."""
    rows, lanes = x2.shape
    dtype = x2.dtype
    itemsize = jnp.dtype(dtype).itemsize
    # Native sublane tiling: (8,128) f32, (16,128) bf16, (32,128) 8-bit.
    row_align = 8 if itemsize >= 4 else (16 if itemsize == 2 else 32)

    total_bytes = rows * lanes * itemsize
    # Rows per block from the byte target (dtype-aware: bf16 gets 2x the rows
    # for the same per-step DMA time / VMEM footprint).
    br = max(row_align, (target_block_bytes // (lanes * itemsize)) // row_align * row_align)
    if total_bytes > (2 << 20) and min_grid_steps > 1:
        # Keep >= min_grid_steps steps for anything past a couple of MiB so the
        # "parallel" row axis can be sharded across v7x's two TensorCores.
        cap = max(row_align, (pl.cdiv(rows, min_grid_steps) // row_align) * row_align)
        br = min(br, cap)
    # block_rows must be a multiple of row_align OR equal to the full extent.
    block_rows = rows if rows <= br else br

    # Ragged grid: the last block may be partial; Pallas masks its OOB stores.
    grid = (pl.cdiv(rows, block_rows),)

    block_bytes = block_rows * lanes * itemsize
    # in + out, double-buffered, plus headroom; stays under v7x's 64 MiB physical.
    vmem_limit = min(max(4 * block_bytes + (4 << 20), 16 << 20), 48 << 20)

    n = rows * lanes
    cost = pl.CostEstimate(
        flops=8 * n,
        transcendentals=2 * n,          # exp + divide per element
        bytes_accessed=2 * n * itemsize,
    )

    return pl.pallas_call(
        _mish_kernel,
        out_shape=jax.ShapeDtypeStruct((rows, lanes), dtype),
        grid_spec=pl.GridSpec(
            grid=grid,
            in_specs=[pl.BlockSpec((block_rows, lanes), lambda r: (r, 0))],
            out_specs=pl.BlockSpec((block_rows, lanes), lambda r: (r, 0)),
        ),
        compiler_params=pltpu.CompilerParams(
            dimension_semantics=("parallel",),
            vmem_limit_bytes=vmem_limit,
        ),
        cost_estimate=cost,
        input_output_aliases=({0: 0} if donate else {}),
    )(x2)


def mish(x, *, target_block_bytes=8 << 20, min_grid_steps=4, donate=False):
    """Elementwise Mish over an array of any shape / floating dtype."""
    orig_shape = x.shape
    dtype = x.dtype
    total = math.prod(orig_shape) if orig_shape else 1
    if total == 0:
        return x

    itemsize = jnp.dtype(dtype).itemsize
    last = orig_shape[-1] if orig_shape else 1
    flat = jnp.reshape(x, (-1,))        # layout-preserving reshape: free

    # ---- choose a lane-dense (rows, lanes) view that needs NO copy ----
    if last % _LANE == 0 and last * itemsize <= target_block_bytes // 16:
        lanes = last                    # native trailing dim (free reshape)
    elif total % _LANE == 0:
        lanes = _LANE                   # largest 128*2^k divisor of total
        while lanes * 2 <= 4096 and total % (lanes * 2) == 0:
            lanes *= 2
    else:
        lanes = 0                       # non-128-aligned total -> tail path

    if lanes:
        rows = total // lanes
        out2 = _mish_2d(flat.reshape(rows, lanes),
                        target_block_bytes=target_block_bytes,
                        min_grid_steps=min_grid_steps, donate=donate)
        return out2.reshape(orig_shape)

    # ---- rare fallback: total % 128 != 0 ----
    # Kernel processes the 128-aligned prefix; the < 128-element tail is done
    # in plain JAX.  No whole-tensor pad of the input.
    main_total = (total // _LANE) * _LANE
    y_tail = _mish_jnp(flat[main_total:])
    if main_total == 0:
        # TODO(synk): inputs smaller than one 128-lane vector skip the kernel.
        out_flat = y_tail
    else:
        lanes = _LANE
        while lanes * 2 <= 4096 and main_total % (lanes * 2) == 0:
            lanes *= 2
        y_main = _mish_2d(flat[:main_total].reshape(main_total // lanes, lanes),
                          target_block_bytes=target_block_bytes,
                          min_grid_steps=min_grid_steps, donate=False)
        out_flat = jnp.concatenate([y_main.reshape(-1), y_tail])
    return out_flat.reshape(orig_shape)


def _mish_ref(x):
    # Plain-JAX reference mirroring PyTorch x * tanh(F.softplus(x)) with
    # softplus threshold = 20.
    sp = jnp.where(x > 20.0, x, jnp.log1p(jnp.exp(jnp.minimum(x, 20.0))))
    return x * jnp.tanh(sp)


if __name__ == "__main__":
    key = jax.random.PRNGKey(0)
    # Small shape consistent with a sequence model: batch=2, seq=8, hidden=32.
    x = jax.random.normal(key, (2, 8, 32), dtype=jnp.float32) * 3.0
    # Exercise the softplus-threshold passthrough and deep-negative regions too.
    x = x.at[0, 0, 0].set(25.0)
    x = x.at[1, 0, 0].set(-30.0)

    y = mish(x)
    jax.block_until_ready(y)
    y_ref = _mish_ref(x)
    assert y.shape == x.shape and y.dtype == x.dtype
    assert jnp.allclose(y, y_ref, atol=1e-5, rtol=1e-5)

    # bf16 path (I/O stays bf16, compute is f32 in-kernel).
    xb = x.astype(jnp.bfloat16)
    yb = mish(xb)
    jax.block_until_ready(yb)
    assert yb.dtype == jnp.bfloat16
    assert jnp.allclose(yb.astype(jnp.float32),
                        _mish_ref(xb.astype(jnp.float32)),
                        atol=2e-2, rtol=2e-2)

    # Ragged row grid (rows not a multiple of block_rows) with a tiny block
    # target to exercise the clipped-last-block path.
    k2 = jax.random.PRNGKey(1)
    x3 = jax.random.normal(k2, (2, 22, 384), dtype=jnp.float32) * 3.0
    y3 = mish(x3, target_block_bytes=32 * 1024)
    jax.block_until_ready(y3)
    assert jnp.allclose(y3, _mish_ref(x3), atol=1e-5, rtol=1e-5)

    # Non-128-aligned total (fallback: kernel prefix + plain-JAX tail).
    k3 = jax.random.PRNGKey(2)
    x4 = jax.random.normal(k3, (5, 7, 13), dtype=jnp.float32) * 3.0
    y4 = mish(x4)
    jax.block_until_ready(y4)
    assert jnp.allclose(y4, _mish_ref(x4), atol=1e-5, rtol=1e-5)

    print("KERNEL_OK")
</pallas_src>

<mosaic_0001>
module attributes {stable_mosaic.version = 11 : i64} {
  func.func @_mish_kernel(%arg0: i32, %arg1: memref<1x512xf32, #tpu.memory_space<vmem>>, %arg2: memref<1x512xf32, #tpu.memory_space<vmem>>) attributes {dimension_semantics = [#tpu.dimension_semantics<parallel>], iteration_bounds = array<i64: 1>, scalar_prefetch = 0 : i64, scratch_operands = 0 : i64, tpu.core_type = #tpu.core_type<tc>, window_params = [{transform_indices = @transform_0, window_bounds = array<i64: 1, 512>}, {transform_indices = @transform_1, window_bounds = array<i64: 1, 512>}]} {
    %c0 = arith.constant 0 : index
    %c0_0 = arith.constant 0 : index
    %0 = vector.load %arg1[%c0, %c0_0] : memref<1x512xf32, #tpu.memory_space<vmem>>, vector<1x512xf32>
    %cst = arith.constant 2.000000e+01 : f32
    %1 = vector.broadcast %cst : f32 to vector<1x512xf32>
    %2 = arith.minimumf %0, %1 : vector<1x512xf32>
    %3 = math.exp %2 : vector<1x512xf32>
    %cst_1 = arith.constant 2.000000e+00 : f32
    %4 = vector.broadcast %cst_1 : f32 to vector<1x512xf32>
    %5 = arith.addf %3, %4 : vector<1x512xf32>
    %6 = arith.mulf %3, %5 : vector<1x512xf32>
    %cst_2 = arith.constant 2.000000e+00 : f32
    %7 = vector.broadcast %cst_2 : f32 to vector<1x512xf32>
    %8 = arith.addf %6, %7 : vector<1x512xf32>
    %9 = arith.divf %6, %8 : vector<1x512xf32>
    %cst_3 = arith.constant 2.000000e+01 : f32
    %10 = vector.broadcast %cst_3 : f32 to vector<1x512xf32>
    %11 = arith.cmpf ogt, %0, %10 : vector<1x512xf32>
    %12 = arith.mulf %0, %9 : vector<1x512xf32>
    %13 = arith.select %11, %0, %12 : vector<1x512xi1>, vector<1x512xf32>
    %c0_4 = arith.constant 0 : index
    %c0_5 = arith.constant 0 : index
    %14 = vector.load %arg2[%c0_4, %c0_5] : memref<1x512xf32, #tpu.memory_space<vmem>>, vector<1x512xf32>
    tpu.vector_store %arg2[%c0_4, %c0_5], %13 {strides = array<i32>} : memref<1x512xf32, #tpu.memory_space<vmem>>, vector<1x512xf32>,
    return
  }
  func.func @transform_0(%arg0: i32) -> (i32, i32) {
    %c0_i32 = arith.constant 0 : i32
    %c0_i32_0 = arith.constant 0 : i32
    return %arg0, %c0_i32 : i32, i32
  }
  func.func @transform_1(%arg0: i32) -> (i32, i32) {
    %c0_i32 = arith.constant 0 : i32
    %c0_i32_0 = arith.constant 0 : i32
    return %arg0, %c0_i32 : i32, i32
  }
}

</mosaic_0001>

<llo_original>
// kernel: tpu_custom_call.1
$region0: #{tpu_custom_call.1}
  #allocation0 [shape = 'u32[]', space=smem, size = 0x4, offset = 0x4, fixed_abs, tag = 'smem constant byte address 0x4 - core index']
  #allocation1 [shape = 'u32[144,128]{1,0:T(1,128)}', space=vmem, size = 0x12000, scoped, tag = 'internal scratch']
  %s0 = inlined_call_operand.hbm [shape: f32[1,512], index: 0, kind: input, shape index: {}]
  %s1 = inlined_call_operand.hbm [shape: f32[1,512], index: 1, kind: output, shape index: {}]
  %s2 = sld [smem:[#allocation0]]
  $region18: #{tpu_custom_call.1} parent=0
    _
  %s4 = ssub.s32 1, %s2
  %s5 = scalar_select 0, %s4, %s2
  $region1: #{tpu_custom_call.1} parent=0
    #allocation2 [shape = 'u8[2048]{0}', space=vmem, size = 0x800, scoped, tag = 'input window, operand 0, single buffered']
    #allocation3 [shape = 's32[1]{0}', space=sflag, size = 0x4, scoped, tag = 'scoped memory for tpu_custom_call.1']
    #allocation4 [shape = 's32[1]{0}', space=sflag, size = 0x4, scoped, tag = 'scoped memory for tpu_custom_call.1']
    #allocation5 [shape = 'u8[2048]{0}', space=vmem, size = 0x800, scoped, tag = 'output window, operand 0, single buffered']
    %6 = vsyncpa [#allocation3], 0
    %7 = vsyncpa [#allocation4], 0
    // Predicated region
    $region2: #{tpu_custom_call.1} parent=1 // pred_check
      _
    $region3: #{tpu_custom_call.1} parent=1 // pred_check_branch
      %9 = sbr.rel (0) target = $region5
    $region4: #{tpu_custom_call.1} parent=1 // pred_region
      %s11 = ssub.s32 64, 64
      %12 = vsyncadd [#allocation3], %s11
      %s14 = sshll.u32 [#allocation2], 4
      %s15 = int_to_ptr.vmem [resolvable:$true] %s14
      %17 = dma.hbm_to_vmem [thread:$0]  %s0, 64, %s15, [#allocation3]
    $region5: #{tpu_custom_call.1} parent=1 // pred_fallthru
      _
    // Predicated region
    $region6: #{tpu_custom_call.1} parent=1 // pred_check
      _
    $region7: #{tpu_custom_call.1} parent=1 // pred_check_branch
      %19 = sbr.rel (0) target = $region9
    $region8: #{tpu_custom_call.1} parent=1 // pred_region
      %20 = dma.done [#allocation3], 64
    $region9: #{tpu_custom_call.1} parent=1 // pred_fallthru
      _
    %v21 = vld [vmem:[#allocation2] sm:$0xf]
    %v22 = vmin.f32 %v21, 20.0
    %v23 = vmul.f32 %v22, 1.442695
    %v24 = vpow.pop %v23
    %v25 = vadd.f32 %v24, 2.0
    %v26 = vmul.f32 %v24, %v25
    %v27 = vadd.f32 %v26, 2.0
    %v28 = vrcp.pop %v27
    %v29 = vmul.f32 %v26, %v28
    %vm30 = vcmp.gt.f32.partialorder %v21, 20.0
    %v31 = vmul.f32 %v21, %v29
    %v32 = vsel %vm30, %v21, %v31
    %v33 = vlaneseq
    %vm34 = vcmp.ge.s32.totalorder %v33, 0
    %vm35 = vcmp.lt.s32.totalorder %v33, 512
    %vm36 = vmand %vm34, %vm35
    %37 = vst.msk [vmem:[#allocation5] sm:$0xf] %vm36, %v32
    // Predicated region
    $region10: #{tpu_custom_call.1} parent=1 // pred_check
      _
    $region11: #{tpu_custom_call.1} parent=1 // pred_check_branch
      %39 = sbr.rel (0) target = $region13
    $region12: #{tpu_custom_call.1} parent=1 // pred_region
      %s41 = ssub.s32 64, 64
      %42 = vsyncadd [#allocation4], %s41
      %s44 = sshll.u32 [#allocation5], 4
      %s45 = int_to_ptr.vmem [resolvable:$true] %s44
      %47 = dma.vmem_to_hbm [thread:$0]  %s45, 64, %s1, [#allocation4]
    $region13: #{tpu_custom_call.1} parent=1 // pred_fallthru
      _
    // Predicated region
    $region14: #{tpu_custom_call.1} parent=1 // pred_check
      _
    $region15: #{tpu_custom_call.1} parent=1 // pred_check_branch
      %49 = sbr.rel (0) target = $region17
    $region16: #{tpu_custom_call.1} parent=1 // pred_region
      %50 = dma.done [#allocation4], 64
    $region17: #{tpu_custom_call.1} parent=1 // pred_fallthru
      _
    %51 = vsyncpa [#allocation3], 1
    %52 = vsyncpa [#allocation4], 1

</llo_original>
